<compile_context>
chip_gen: v7x
topology: tpu7x:2x2x1
jax: 0.10.0
libtpu: 0.0.40
codegen_flags: <defaults>
</compile_context>

<pallas_src>
import math

import jax
import jax.numpy as jnp
from jax.experimental import pallas as pl
from jax.experimental.pallas import tpu as pltpu


def _round_up(n, m):
    return ((n + m - 1) // m) * m


# --------------------------------------------------------------------------- #
# Kernel
# --------------------------------------------------------------------------- #
def _res_time_mlp_kernel(x_ref, t_ref, wx_ref, bx_ref, wt_ref, bt_ref, o_ref):
    """One (row-tile, out-channel-tile) block.

    Weight blocks are packed per output tile as [fc_cols | res_cols] and
    [scale_cols | shift_cols], so every in-kernel slice lands on a
    lane-aligned (multiple-of-128) boundary.

        xw  = x @ [W_fc | W_res] + [b_fc | b_res]           -> h, res
        tw  = silu(t) @ [W_scale | W_shift] + [b_s | b_sh]  -> scale, shift
        out = h * (scale + 1) + shift + res
    """
    tile_n = o_ref.shape[-1]
    cdt = wx_ref.dtype  # MXU input dtype (f32 or bf16)

    x = x_ref[...].astype(cdt)
    t = t_ref[...]

    # Fused fc + residual-projection matmul (shared LHS, 2*tile_n wide N).
    xw = jnp.dot(x, wx_ref[...], preferred_element_type=jnp.float32)
    xw = xw + bx_ref[...].astype(jnp.float32)
    h = xw[:, :tile_n]
    res = xw[:, tile_n:]

    # Time branch: SiLU (EUP sigmoid + VPU mul) then fused scale/shift matmul.
    # TODO(synk): if t is a per-batch embedding broadcast over the sequence, this
    # branch could be computed once per unique t row instead of per row tile.
    t_act = (t * jax.nn.sigmoid(t)).astype(wt_ref.dtype)
    tw = jnp.dot(t_act, wt_ref[...], preferred_element_type=jnp.float32)
    tw = tw + bt_ref[...].astype(jnp.float32)
    scale = tw[:, :tile_n]
    shift = tw[:, tile_n:]

    # Modulation + residual add (norm / activation / dropout are None here).
    o_ref[...] = (h * (scale + 1.0) + shift + res).astype(o_ref.dtype)


# --------------------------------------------------------------------------- #
# One-time weight packing (hoisted out of the forward path)
# --------------------------------------------------------------------------- #
def pack_params(params, *, tile_n=None, weight_dtype=None):
    """Pack raw per-layer params once into fused, lane-aligned, N-tiled weights.

    Returns a dict holding the packed arrays plus layout metadata; pass it to
    `res_time_mlp_block`.  Do this at model init, not per forward call.
    """
    w_fc, b_fc = params["w_fc"], params["b_fc"]      # [in, out],  [1, out]
    w_t, b_t = params["w_t"], params["b_t"]          # [time, 2*out], [1, 2*out]
    w_res, b_res = params["w_res"], params["b_res"]  # [in, out],  [1, out]

    in_ch, out_ch = w_fc.shape
    time_dim = w_t.shape[0]
    out_p = _round_up(out_ch, 128)  # lane-dense output channel count
    # TODO(synk): for out_ch << 128 the pad to 128 lanes dominates cost; packing
    # multiple logical outputs per lane tile would be needed to recover it.

    if tile_n is None:
        if out_p <= 1024:
            tile_n = out_p
        else:
            tile_n = next(c for c in (512, 256, 128) if out_p % c == 0)
    assert tile_n % 128 == 0 and out_p % tile_n == 0
    n_tiles = out_p // tile_n

    def pad_out(a):
        pad = out_p - a.shape[-1]
        return jnp.pad(a, ((0, 0), (0, pad))) if pad else a

    def pack_pair(first, second):
        # [K, out_ch] x2 -> [K, n_tiles * 2 * tile_n], per-tile layout [first|second].
        k = first.shape[0]
        f = pad_out(first).reshape(k, n_tiles, tile_n)
        s = pad_out(second).reshape(k, n_tiles, tile_n)
        packed = jnp.concatenate([f, s], axis=-1).reshape(k, n_tiles * 2 * tile_n)
        return packed if weight_dtype is None else packed.astype(weight_dtype)

    return {
        "w_x": pack_pair(w_fc, w_res),                         # [in, nt*2*tn]
        "b_x": pack_pair(b_fc, b_res),                         # [1, nt*2*tn]
        "w_tc": pack_pair(w_t[:, :out_ch], w_t[:, out_ch:]),   # [time, nt*2*tn]
        "b_tc": pack_pair(b_t[:, :out_ch], b_t[:, out_ch:]),   # [1, nt*2*tn]
        "in_ch": in_ch, "out_ch": out_ch, "out_p": out_p,
        "time_dim": time_dim, "tile_n": tile_n, "n_tiles": n_tiles,
    }


# --------------------------------------------------------------------------- #
# Forward wrapper
# --------------------------------------------------------------------------- #
def res_time_mlp_block(x, t, packed, *, tile_m=None, vmem_limit_bytes=None):
    """x: [..., in_channels], t: [..., time_dim] (matching leading dims).

    `packed` must come from `pack_params`.  Returns [..., out_channels].
    """
    in_ch, out_ch, out_p = packed["in_ch"], packed["out_ch"], packed["out_p"]
    time_dim, tile_n, n_tiles = packed["time_dim"], packed["tile_n"], packed["n_tiles"]
    w_x, b_x, w_tc, b_tc = packed["w_x"], packed["b_x"], packed["w_tc"], packed["b_tc"]

    lead_shape = x.shape[:-1]
    m = int(math.prod(lead_shape)) if lead_shape else 1
    x2 = x.reshape(m, in_ch)
    t2 = t.reshape(m, time_dim)
    itemsize = x.dtype.itemsize
    w_itemsize = w_x.dtype.itemsize

    # --- generation-aware VMEM budget ----------------------------------------
    if vmem_limit_bytes is None:
        try:
            phys = int(pltpu.get_tpu_info().vmem_capacity_bytes)
        except Exception:
            phys = 64 * 1024 * 1024  # safe floor: v7x per-TC VMEM
        # ~75% of physical, capped at 96 MiB: 96 MiB on v5e/v6e, 48 MiB on v7x.
        vmem_limit_bytes = min(phys * 3 // 4, 96 * 1024 * 1024)
    vmem_limit_bytes = int(vmem_limit_bytes)

    # --- VMEM-aware row tile ---------------------------------------------------
    # One N-tile of each weight/bias, conservatively assumed double-buffered.
    weight_block_bytes = 2 * (in_ch + time_dim + 2) * 2 * tile_n * w_itemsize
    if tile_m is None:
        # Per-row cost: double-buffered x/t/out streams + f32 intermediates
        # (xw, tw and their slices), plus slack.
        row_bytes = 2 * (in_ch + time_dim + tile_n) * itemsize + 24 * tile_n + 64
        budget = vmem_limit_bytes - weight_block_bytes - (4 << 20)
        tile_m = max(8, budget // row_bytes)
    tile_m = int(max(8, min(tile_m, 4096)))
    tile_m = min(tile_m, _round_up(m, 8))
    if tile_m >= 256 and m >= 256:
        tile_m = (tile_m // 256) * 256   # MXU-M aligned (also a multiple of 128 for v5e)
    elif tile_m >= 128 and m >= 128:
        tile_m = (tile_m // 128) * 128
    else:
        tile_m = max(8, (tile_m // 8) * 8)
    m_p = _round_up(m, tile_m)

    if m_p != m:
        x2 = jnp.pad(x2, ((0, m_p - m), (0, 0)))
        t2 = jnp.pad(t2, ((0, m_p - m), (0, 0)))

    grid = (m_p // tile_m, n_tiles)

    cost = pl.CostEstimate(
        flops=2 * m_p * (in_ch + time_dim) * 2 * out_p,
        transcendentals=2 * m_p * time_dim * n_tiles,
        bytes_accessed=(x2.size + t2.size + m_p * out_p) * itemsize
        + (w_x.size + b_x.size + w_tc.size + b_tc.size) * w_itemsize
        * ((m_p // tile_m) if n_tiles > 1 else 1),
    )

    def build(weight_pipeline_mode):
        wkw = {} if weight_pipeline_mode is None else {"pipeline_mode": weight_pipeline_mode}
        return pl.pallas_call(
            _res_time_mlp_kernel,
            out_shape=jax.ShapeDtypeStruct((m_p, out_p), x.dtype),
            grid_spec=pltpu.PrefetchScalarGridSpec(
                num_scalar_prefetch=0,
                grid=grid,
                in_specs=[
                    pl.BlockSpec((tile_m, in_ch), lambda i, n: (i, 0)),        # x tile
                    pl.BlockSpec((tile_m, time_dim), lambda i, n: (i, 0)),     # t tile
                    pl.BlockSpec((in_ch, 2 * tile_n), lambda i, n: (0, n), **wkw),    # W_fc|W_res
                    pl.BlockSpec((1, 2 * tile_n), lambda i, n: (0, n), **wkw),        # b_fc|b_res
                    pl.BlockSpec((time_dim, 2 * tile_n), lambda i, n: (0, n), **wkw),  # W_scale|W_shift
                    pl.BlockSpec((1, 2 * tile_n), lambda i, n: (0, n), **wkw),        # b_scale|b_shift
                ],
                out_specs=pl.BlockSpec((tile_m, tile_n), lambda i, n: (i, n)),
            ),
            compiler_params=pltpu.CompilerParams(
                dimension_semantics=("parallel", "parallel"),
                vmem_limit_bytes=vmem_limit_bytes,
            ),
            cost_estimate=cost,
        )

    # Weights/biases are grid-invariant when there is a single N tile: single
    # buffering halves their VMEM footprint (matters most on v7x's 64 MiB).
    try:
        mode = pl.Buffered(1) if n_tiles == 1 else None
        out = build(mode)(x2, t2, w_x, b_x, w_tc, b_tc)
    except Exception:
        out = build(None)(x2, t2, w_x, b_x, w_tc, b_tc)

    out = out[:m, :out_ch]
    return out.reshape(*lead_shape, out_ch)


# --------------------------------------------------------------------------- #
# Init + reference
# --------------------------------------------------------------------------- #
def init_params(key, in_channels, out_channels, time_dim, dtype=jnp.float32):
    """Deterministic synthetic init (PyTorch-style uniform bound 1/sqrt(fan_in)).

    Weights are stored already transposed to [in, out] layout.
    """
    ks = jax.random.split(key, 6)

    def lin(kw, kb, fan_in, fan_out):
        bound = 1.0 / jnp.sqrt(fan_in)
        w = jax.random.uniform(kw, (fan_in, fan_out), dtype, -bound, bound)
        b = jax.random.uniform(kb, (1, fan_out), dtype, -bound, bound)
        return w, b

    w_fc, b_fc = lin(ks[0], ks[1], in_channels, out_channels)       # self.fc
    w_t, b_t = lin(ks[2], ks[3], time_dim, 2 * out_channels)        # self.mlp[1]
    w_res, b_res = lin(ks[4], ks[5], in_channels, out_channels)     # self.res_mlp
    return {"w_fc": w_fc, "b_fc": b_fc,
            "w_t": w_t, "b_t": b_t,
            "w_res": w_res, "b_res": b_res}


def reference(x, t, p):
    """Pure-JAX reference of the PyTorch forward (norm/activation/dropout None)."""
    h = x @ p["w_fc"] + p["b_fc"][0]
    tm = jax.nn.silu(t) @ p["w_t"] + p["b_t"][0]
    out_ch = p["w_fc"].shape[1]
    scale, shift = tm[..., :out_ch], tm[..., out_ch:]
    res = x @ p["w_res"] + p["b_res"][0]
    return h * (scale + 1.0) + shift + res


if __name__ == "__main__":
    B, S = 2, 8
    IN_CH, OUT_CH, TIME_DIM = 16, 32, 8

    key = jax.random.PRNGKey(0)
    kx, kt, kp = jax.random.split(key, 3)

    x = jax.random.normal(kx, (B, S, IN_CH), jnp.float32)
    t = jax.random.normal(kt, (B, S, TIME_DIM), jnp.float32)
    params = init_params(kp, IN_CH, OUT_CH, TIME_DIM)

    # Pack once at init (hoisted out of the per-call path).
    packed = pack_params(params)

    out = res_time_mlp_block(x, t, packed)
    out = jax.block_until_ready(out)

    ref = reference(x, t, params)
    assert out.shape == (B, S, OUT_CH), out.shape
    assert jnp.allclose(out, ref, atol=1e-4, rtol=1e-4), float(jnp.max(jnp.abs(out - ref)))

    print("KERNEL_OK")
</pallas_src>

<mosaic_0001>
module attributes {stable_mosaic.version = 11 : i64} {
  func.func @_res_time_mlp_kernel(%arg0: i32, %arg1: i32, %arg2: memref<16x16xf32, #tpu.memory_space<vmem>>, %arg3: memref<16x8xf32, #tpu.memory_space<vmem>>, %arg4: memref<16x256xf32, #tpu.memory_space<vmem>>, %arg5: memref<1x256xf32, #tpu.memory_space<vmem>>, %arg6: memref<8x256xf32, #tpu.memory_space<vmem>>, %arg7: memref<1x256xf32, #tpu.memory_space<vmem>>, %arg8: memref<16x128xf32, #tpu.memory_space<vmem>>) attributes {dimension_semantics = [#tpu.dimension_semantics<parallel>, #tpu.dimension_semantics<parallel>], iteration_bounds = array<i64: 1, 1>, scalar_prefetch = 0 : i64, scratch_operands = 0 : i64, tpu.core_type = #tpu.core_type<tc>, window_params = [{transform_indices = @transform_0, window_bounds = array<i64: 16, 16>}, {transform_indices = @transform_1, window_bounds = array<i64: 16, 8>}, {pipeline_mode = #tpu.pipeline_mode<synchronous>, transform_indices = @transform_2, window_bounds = array<i64: 16, 256>}, {pipeline_mode = #tpu.pipeline_mode<synchronous>, transform_indices = @transform_3, window_bounds = array<i64: 1, 256>}, {pipeline_mode = #tpu.pipeline_mode<synchronous>, transform_indices = @transform_4, window_bounds = array<i64: 8, 256>}, {pipeline_mode = #tpu.pipeline_mode<synchronous>, transform_indices = @transform_5, window_bounds = array<i64: 1, 256>}, {transform_indices = @transform_6, window_bounds = array<i64: 16, 128>}]} {
    %c0 = arith.constant 0 : index
    %c0_0 = arith.constant 0 : index
    %0 = vector.load %arg2[%c0, %c0_0] : memref<16x16xf32, #tpu.memory_space<vmem>>, vector<16x16xf32>
    %c0_1 = arith.constant 0 : index
    %c0_2 = arith.constant 0 : index
    %1 = vector.load %arg3[%c0_1, %c0_2] : memref<16x8xf32, #tpu.memory_space<vmem>>, vector<16x8xf32>
    %c0_3 = arith.constant 0 : index
    %c0_4 = arith.constant 0 : index
    %2 = vector.load %arg4[%c0_3, %c0_4] : memref<16x256xf32, #tpu.memory_space<vmem>>, vector<16x256xf32>
    %cst = arith.constant dense<0.000000e+00> : vector<16x256xf32>
    %3 = tpu.matmul %0, %2, %cst {dimension_numbers = #tpu.dot_dimension_numbers<[1], [0], [0], [1], [0, 0, 1, 1], [], []>} : vector<16x16xf32>, vector<16x256xf32>, vector<16x256xf32> -> vector<16x256xf32>
    %c0_5 = arith.constant 0 : index
    %c0_6 = arith.constant 0 : index
    %4 = vector.load %arg5[%c0_5, %c0_6] : memref<1x256xf32, #tpu.memory_space<vmem>>, vector<1x256xf32>
    %5 = vector.broadcast %4 : vector<1x256xf32> to vector<16x256xf32>
    %6 = arith.addf %3, %5 : vector<16x256xf32>
    %7 = vector.extract_strided_slice %6 {offsets = [0, 0], sizes = [16, 128], strides = [1, 1]} : vector<16x256xf32> to vector<16x128xf32>
    %8 = vector.extract_strided_slice %6 {offsets = [0, 128], sizes = [16, 128], strides = [1, 1]} : vector<16x256xf32> to vector<16x128xf32>
    %9 = arith.negf %1 : vector<16x8xf32>
    %10 = math.exp %9 : vector<16x8xf32>
    %cst_7 = arith.constant 1.000000e+00 : f32
    %11 = vector.broadcast %cst_7 : f32 to vector<16x8xf32>
    %12 = arith.addf %11, %10 : vector<16x8xf32>
    %13 = arith.divf %11, %12 : vector<16x8xf32>
    %14 = arith.mulf %1, %13 : vector<16x8xf32>
    %c0_8 = arith.constant 0 : index
    %c0_9 = arith.constant 0 : index
    %15 = vector.load %arg6[%c0_8, %c0_9] : memref<8x256xf32, #tpu.memory_space<vmem>>, vector<8x256xf32>
    %cst_10 = arith.constant dense<0.000000e+00> : vector<16x256xf32>
    %16 = tpu.matmul %14, %15, %cst_10 {dimension_numbers = #tpu.dot_dimension_numbers<[1], [0], [0], [1], [0, 0, 1, 1], [], []>} : vector<16x8xf32>, vector<8x256xf32>, vector<16x256xf32> -> vector<16x256xf32>
    %c0_11 = arith.constant 0 : index
    %c0_12 = arith.constant 0 : index
    %17 = vector.load %arg7[%c0_11, %c0_12] : memref<1x256xf32, #tpu.memory_space<vmem>>, vector<1x256xf32>
    %18 = vector.broadcast %17 : vector<1x256xf32> to vector<16x256xf32>
    %19 = arith.addf %16, %18 : vector<16x256xf32>
    %20 = vector.extract_strided_slice %19 {offsets = [0, 0], sizes = [16, 128], strides = [1, 1]} : vector<16x256xf32> to vector<16x128xf32>
    %21 = vector.extract_strided_slice %19 {offsets = [0, 128], sizes = [16, 128], strides = [1, 1]} : vector<16x256xf32> to vector<16x128xf32>
    %cst_13 = arith.constant 1.000000e+00 : f32
    %22 = vector.broadcast %cst_13 : f32 to vector<16x128xf32>
    %23 = arith.addf %20, %22 : vector<16x128xf32>
    %24 = arith.mulf %7, %23 : vector<16x128xf32>
    %25 = arith.addf %24, %21 : vector<16x128xf32>
    %26 = arith.addf %25, %8 : vector<16x128xf32>
    %c0_14 = arith.constant 0 : index
    %c0_15 = arith.constant 0 : index
    %27 = vector.load %arg8[%c0_14, %c0_15] : memref<16x128xf32, #tpu.memory_space<vmem>>, vector<16x128xf32>
    tpu.vector_store %arg8[%c0_14, %c0_15], %26 {strides = array<i32>} : memref<16x128xf32, #tpu.memory_space<vmem>>, vector<16x128xf32>,
    return
  }
  func.func @transform_0(%arg0: i32, %arg1: i32) -> (i32, i32) {
    %c0_i32 = arith.constant 0 : i32
    %c0_i32_0 = arith.constant 0 : i32
    return %arg0, %c0_i32 : i32, i32
  }
  func.func @transform_1(%arg0: i32, %arg1: i32) -> (i32, i32) {
    %c0_i32 = arith.constant 0 : i32
    %c0_i32_0 = arith.constant 0 : i32
    return %arg0, %c0_i32 : i32, i32
  }
  func.func @transform_2(%arg0: i32, %arg1: i32) -> (i32, i32) {
    %c0_i32 = arith.constant 0 : i32
    %c0_i32_0 = arith.constant 0 : i32
    return %c0_i32, %arg1 : i32, i32
  }
  func.func @transform_3(%arg0: i32, %arg1: i32) -> (i32, i32) {
    %c0_i32 = arith.constant 0 : i32
    %c0_i32_0 = arith.constant 0 : i32
    return %c0_i32, %arg1 : i32, i32
  }
  func.func @transform_4(%arg0: i32, %arg1: i32) -> (i32, i32) {
    %c0_i32 = arith.constant 0 : i32
    %c0_i32_0 = arith.constant 0 : i32
    return %c0_i32, %arg1 : i32, i32
  }
  func.func @transform_5(%arg0: i32, %arg1: i32) -> (i32, i32) {
    %c0_i32 = arith.constant 0 : i32
    %c0_i32_0 = arith.constant 0 : i32
    return %c0_i32, %arg1 : i32, i32
  }
  func.func @transform_6(%arg0: i32, %arg1: i32) -> (i32, i32) {
    %c0_i32 = arith.constant 0 : i32
    return %arg0, %arg1 : i32, i32
  }
}

module attributes {stable_mosaic.version = 11 : i64} {
  func.func @_res_time_mlp_kernel(%arg0: i32, %arg1: i32, %arg2: memref<16x16xf32, #tpu.memory_space<vmem>>, %arg3: memref<16x8xf32, #tpu.memory_space<vmem>>, %arg4: memref<16x256xf32, #tpu.memory_space<vmem>>, %arg5: memref<1x256xf32, #tpu.memory_space<vmem>>, %arg6: memref<8x256xf32, #tpu.memory_space<vmem>>, %arg7: memref<1x256xf32, #tpu.memory_space<vmem>>, %arg8: memref<16x128xf32, #tpu.memory_space<vmem>>) attributes {dimension_semantics = [#tpu.dimension_semantics<parallel>, #tpu.dimension_semantics<parallel>], iteration_bounds = array<i64: 1, 1>, scalar_prefetch = 0 : i64, scratch_operands = 0 : i64, tpu.core_type = #tpu.core_type<tc>, window_params = [{transform_indices = @transform_0, window_bounds = array<i64: 16, 16>}, {transform_indices = @transform_1, window_bounds = array<i64: 16, 8>}, {transform_indices = @transform_2, window_bounds = array<i64: 16, 256>}, {transform_indices = @transform_3, window_bounds = array<i64: 1, 256>}, {transform_indices = @transform_4, window_bounds = array<i64: 8, 256>}, {transform_indices = @transform_5, window_bounds = array<i64: 1, 256>}, {transform_indices = @transform_6, window_bounds = array<i64: 16, 128>}]} {
    %c0 = arith.constant 0 : index
    %c0_0 = arith.constant 0 : index
    %0 = vector.load %arg2[%c0, %c0_0] : memref<16x16xf32, #tpu.memory_space<vmem>>, vector<16x16xf32>
    %c0_1 = arith.constant 0 : index
    %c0_2 = arith.constant 0 : index
    %1 = vector.load %arg3[%c0_1, %c0_2] : memref<16x8xf32, #tpu.memory_space<vmem>>, vector<16x8xf32>
    %c0_3 = arith.constant 0 : index
    %c0_4 = arith.constant 0 : index
    %2 = vector.load %arg4[%c0_3, %c0_4] : memref<16x256xf32, #tpu.memory_space<vmem>>, vector<16x256xf32>
    %cst = arith.constant dense<0.000000e+00> : vector<16x256xf32>
    %3 = tpu.matmul %0, %2, %cst {dimension_numbers = #tpu.dot_dimension_numbers<[1], [0], [0], [1], [0, 0, 1, 1], [], []>} : vector<16x16xf32>, vector<16x256xf32>, vector<16x256xf32> -> vector<16x256xf32>
    %c0_5 = arith.constant 0 : index
    %c0_6 = arith.constant 0 : index
    %4 = vector.load %arg5[%c0_5, %c0_6] : memref<1x256xf32, #tpu.memory_space<vmem>>, vector<1x256xf32>
    %5 = vector.broadcast %4 : vector<1x256xf32> to vector<16x256xf32>
    %6 = arith.addf %3, %5 : vector<16x256xf32>
    %7 = vector.extract_strided_slice %6 {offsets = [0, 0], sizes = [16, 128], strides = [1, 1]} : vector<16x256xf32> to vector<16x128xf32>
    %8 = vector.extract_strided_slice %6 {offsets = [0, 128], sizes = [16, 128], strides = [1, 1]} : vector<16x256xf32> to vector<16x128xf32>
    %9 = arith.negf %1 : vector<16x8xf32>
    %10 = math.exp %9 : vector<16x8xf32>
    %cst_7 = arith.constant 1.000000e+00 : f32
    %11 = vector.broadcast %cst_7 : f32 to vector<16x8xf32>
    %12 = arith.addf %11, %10 : vector<16x8xf32>
    %13 = arith.divf %11, %12 : vector<16x8xf32>
    %14 = arith.mulf %1, %13 : vector<16x8xf32>
    %c0_8 = arith.constant 0 : index
    %c0_9 = arith.constant 0 : index
    %15 = vector.load %arg6[%c0_8, %c0_9] : memref<8x256xf32, #tpu.memory_space<vmem>>, vector<8x256xf32>
    %cst_10 = arith.constant dense<0.000000e+00> : vector<16x256xf32>
    %16 = tpu.matmul %14, %15, %cst_10 {dimension_numbers = #tpu.dot_dimension_numbers<[1], [0], [0], [1], [0, 0, 1, 1], [], []>} : vector<16x8xf32>, vector<8x256xf32>, vector<16x256xf32> -> vector<16x256xf32>
    %c0_11 = arith.constant 0 : index
    %c0_12 = arith.constant 0 : index
    %17 = vector.load %arg7[%c0_11, %c0_12] : memref<1x256xf32, #tpu.memory_space<vmem>>, vector<1x256xf32>
    %18 = vector.broadcast %17 : vector<1x256xf32> to vector<16x256xf32>
    %19 = arith.addf %16, %18 : vector<16x256xf32>
    %20 = vector.extract_strided_slice %19 {offsets = [0, 0], sizes = [16, 128], strides = [1, 1]} : vector<16x256xf32> to vector<16x128xf32>
    %21 = vector.extract_strided_slice %19 {offsets = [0, 128], sizes = [16, 128], strides = [1, 1]} : vector<16x256xf32> to vector<16x128xf32>
    %cst_13 = arith.constant 1.000000e+00 : f32
    %22 = vector.broadcast %cst_13 : f32 to vector<16x128xf32>
    %23 = arith.addf %20, %22 : vector<16x128xf32>
    %24 = arith.mulf %7, %23 : vector<16x128xf32>
    %25 = arith.addf %24, %21 : vector<16x128xf32>
    %26 = arith.addf %25, %8 : vector<16x128xf32>
    %c0_14 = arith.constant 0 : index
    %c0_15 = arith.constant 0 : index
    %27 = vector.load %arg8[%c0_14, %c0_15] : memref<16x128xf32, #tpu.memory_space<vmem>>, vector<16x128xf32>
    tpu.vector_store %arg8[%c0_14, %c0_15], %26 {strides = array<i32>} : memref<16x128xf32, #tpu.memory_space<vmem>>, vector<16x128xf32>,
    return
  }
  func.func @transform_0(%arg0: i32, %arg1: i32) -> (i32, i32) {
    %c0_i32 = arith.constant 0 : i32
    %c0_i32_0 = arith.constant 0 : i32
    return %arg0, %c0_i32 : i32, i32
  }
  func.func @transform_1(%arg0: i32, %arg1: i32) -> (i32, i32) {
    %c0_i32 = arith.constant 0 : i32
    %c0_i32_0 = arith.constant 0 : i32
    return %arg0, %c0_i32 : i32, i32
  }
  func.func @transform_2(%arg0: i32, %arg1: i32) -> (i32, i32) {
    %c0_i32 = arith.constant 0 : i32
    %c0_i32_0 = arith.constant 0 : i32
    return %c0_i32, %arg1 : i32, i32
  }
  func.func @transform_3(%arg0: i32, %arg1: i32) -> (i32, i32) {
    %c0_i32 = arith.constant 0 : i32
    %c0_i32_0 = arith.constant 0 : i32
    return %c0_i32, %arg1 : i32, i32
  }
  func.func @transform_4(%arg0: i32, %arg1: i32) -> (i32, i32) {
    %c0_i32 = arith.constant 0 : i32
    %c0_i32_0 = arith.constant 0 : i32
    return %c0_i32, %arg1 : i32, i32
  }
  func.func @transform_5(%arg0: i32, %arg1: i32) -> (i32, i32) {
    %c0_i32 = arith.constant 0 : i32
    %c0_i32_0 = arith.constant 0 : i32
    return %c0_i32, %arg1 : i32, i32
  }
  func.func @transform_6(%arg0: i32, %arg1: i32) -> (i32, i32) {
    %c0_i32 = arith.constant 0 : i32
    return %arg0, %arg1 : i32, i32
  }
}

</mosaic_0001>

<llo_original>
// kernel: tpu_custom_call.1
$region0: #{tpu_custom_call.1}
  #allocation0 [shape = 'u32[]', space=smem, size = 0x4, offset = 0x4, fixed_abs, tag = 'smem constant byte address 0x4 - core index']
  #allocation1 [shape = 'u32[144,128]{1,0:T(1,128)}', space=vmem, size = 0x12000, scoped, tag = 'internal scratch']
  %s0 = inlined_call_operand.vmem [shape: f32[16,16], index: 0, kind: input, shape index: {}]
  %s1 = inlined_call_operand.vmem [shape: f32[16,8], index: 1, kind: input, shape index: {}]
  %s2 = inlined_call_operand.hbm [shape: f32[16,256], index: 2, kind: input, shape index: {}]
  %s3 = inlined_call_operand.vmem [shape: f32[1,256], index: 3, kind: input, shape index: {}]
  %s4 = inlined_call_operand.vmem [shape: f32[8,256], index: 4, kind: input, shape index: {}]
  %s5 = inlined_call_operand.vmem [shape: f32[1,256], index: 5, kind: input, shape index: {}]
  %s6 = inlined_call_operand.hbm [shape: f32[16,128], index: 6, kind: output, shape index: {}]
  %s7 = sld [smem:[#allocation0]]
  $region38: #{tpu_custom_call.1} parent=0
    _
  %s9 = ssub.s32 1, %s7
  %s10 = scalar_select 0, %s9, %s7
  $region1: #{tpu_custom_call.1} parent=0
    #allocation2 [shape = 'u8[16384]{0}', space=vmem, size = 0x4000, scoped, tag = 'input window, operand 2, single buffered']
    #allocation3 [shape = 's32[1]{0}', space=sflag, size = 0x4, scoped, tag = 'scoped memory for tpu_custom_call.1']
    #allocation4 [shape = 's32[1]{0}', space=sflag, size = 0x4, scoped, tag = 'scoped memory for tpu_custom_call.1']
    #allocation5 [shape = 'u8[8192]{0}', space=vmem, size = 0x2000, scoped, tag = 'output window, operand 0, single buffered']
    %11 = vsyncpa [#allocation3], 0
    %12 = vsyncpa [#allocation4], 0
    // Predicated region
    $region2: #{tpu_custom_call.1} parent=1 // pred_check
      _
    $region3: #{tpu_custom_call.1} parent=1 // pred_check_branch
      %14 = sbr.rel (0) target = $region5
    $region4: #{tpu_custom_call.1} parent=1 // pred_region
      _
    $region5: #{tpu_custom_call.1} parent=1 // pred_fallthru
      _
    // Predicated region
    $region6: #{tpu_custom_call.1} parent=1 // pred_check
      _
    $region7: #{tpu_custom_call.1} parent=1 // pred_check_branch
      %16 = sbr.rel (0) target = $region9
    $region8: #{tpu_custom_call.1} parent=1 // pred_region
      _
    $region9: #{tpu_custom_call.1} parent=1 // pred_fallthru
      _
    // Predicated region
    $region10: #{tpu_custom_call.1} parent=1 // pred_check
      _
    $region11: #{tpu_custom_call.1} parent=1 // pred_check_branch
      %18 = sbr.rel (0) target = $region13
    $region12: #{tpu_custom_call.1} parent=1 // pred_region
      %s20 = ssub.s32 512, 512
      %21 = vsyncadd [#allocation3], %s20
      %s22 = sshll.u32 [#allocation2], 4
      %s23 = int_to_ptr.vmem [resolvable:$true] %s22
      %28 = dma.hbm_to_vmem [thread:$0]  %s2, 512, %s23, [#allocation3], 256, 256, 16
    $region13: #{tpu_custom_call.1} parent=1 // pred_fallthru
      _
    // Predicated region
    $region14: #{tpu_custom_call.1} parent=1 // pred_check
      _
    $region15: #{tpu_custom_call.1} parent=1 // pred_check_branch
      %30 = sbr.rel (0) target = $region17
    $region16: #{tpu_custom_call.1} parent=1 // pred_region
      _
    $region17: #{tpu_custom_call.1} parent=1 // pred_fallthru
      _
    // Predicated region
    $region18: #{tpu_custom_call.1} parent=1 // pred_check
      _
    $region19: #{tpu_custom_call.1} parent=1 // pred_check_branch
      %32 = sbr.rel (0) target = $region21
    $region20: #{tpu_custom_call.1} parent=1 // pred_region
      _
    $region21: #{tpu_custom_call.1} parent=1 // pred_fallthru
      _
    // Predicated region
    $region22: #{tpu_custom_call.1} parent=1 // pred_check
      _
    $region23: #{tpu_custom_call.1} parent=1 // pred_check_branch
      %34 = sbr.rel (0) target = $region25
    $region24: #{tpu_custom_call.1} parent=1 // pred_region
      _
    $region25: #{tpu_custom_call.1} parent=1 // pred_fallthru
      _
    // Predicated region
    $region26: #{tpu_custom_call.1} parent=1 // pred_check
      _
    $region27: #{tpu_custom_call.1} parent=1 // pred_check_branch
      %36 = sbr.rel (0) target = $region29
    $region28: #{tpu_custom_call.1} parent=1 // pred_region
      %37 = dma.done [#allocation3], 512
    $region29: #{tpu_custom_call.1} parent=1 // pred_fallthru
      _
    %v38 = vld [vmem:[%s0] sm:$0xff]
    %v39 = vld [vmem:[%s0 + $0x8] sm:$0xff]
    %v40 = vld [vmem:[%s1] sm:$0xff]
    %v41 = vld [vmem:[%s1 + $0x8] sm:$0xff]
    %v42 = vld [vmem:[#allocation2] sm:$0xff]
    %v43 = vld [vmem:[#allocation2 + $0x8] sm:$0xff]
    %v44 = vld [vmem:[#allocation2 + $0x10] sm:$0xff]
    %v45 = vld [vmem:[#allocation2 + $0x18] sm:$0xff]
    %v46 = vld [vmem:[%s3] sm:$0x3]
    %v48 = vlaneseq
    %v49 = vshrl.u32 %v48, 7
    %v50 = vsub.s32 0, %v49
    %v51 = vrot.slane %v46, %v50
    %v52 = vlaneseq
    %v53 = vshrl.u32 %v52, 7
    %v54 = vsub.s32 1, %v53
    %v55 = vrot.slane %v46, %v54
    %vm58 = vcmask 130048
    %v60 = vsel %vm58, %v38, 0
    %v63 = vsel %vm58, %v39, 0
    %65 = vmatprep.subr.mxu0 %v43
    %66 = vmatpush1.msra.mxu0 %v42
    %67 = vmatprep.subr.mxu0 %v45
    %68 = vmatpush1.msra.mxu0 %v44
    %69 = vmatprep.subr.mxu0 0.0
    %70 = vmatpush1.msra.mxu0 0.0
    %71 = vmatprep.subr.mxu0 0.0
    %72 = vmatpush1.msra.mxu0 0.0
    %73 = vmatprep.subr.mxu0 0.0
    %74 = vmatpush1.msra.mxu0 0.0
    %75 = vmatprep.subr.mxu0 0.0
    %76 = vmatpush1.msra.mxu0 0.0
    %77 = vmatprep.subr.mxu0 0.0
    %78 = vmatpush1.msra.mxu0 0.0
    %79 = vmatprep.subr.mxu0 0.0
    %80 = vmatpush1.msra.mxu0 0.0
    %81 = vmatprep.subr.mxu0 0.0
    %82 = vmatpush1.msra.mxu0 0.0
    %83 = vmatprep.subr.mxu0 0.0
    %84 = vmatpush1.msra.mxu0 0.0
    %85 = vmatprep.subr.mxu0 0.0
    %86 = vmatpush1.msra.mxu0 0.0
    %87 = vmatprep.subr.mxu0 0.0
    %88 = vmatpush1.msra.mxu0 0.0
    %89 = vmatprep.subr.mxu0 0.0
    %90 = vmatpush1.msra.mxu0 0.0
    %91 = vmatprep.subr.mxu0 0.0
    %92 = vmatpush1.msra.mxu0 0.0
    %93 = vmatprep.subr.mxu0 0.0
    %94 = vmatpush1.msra.mxu0 0.0
    %95 = vmatprep.subr.mxu0 0.0
    %96 = vmatpush1.msra.mxu0 0.0
    %97 = vmatprep.subr.mxu0 0.0
    %98 = vmatpush1.msra.mxu0 0.0
    %99 = vmatprep.subr.mxu0 0.0
    %100 = vmatpush1.msra.mxu0 0.0
    %101 = vmatprep.subr.mxu0 0.0
    %102 = vmatpush1.msra.mxu0 0.0
    %103 = vmatprep.subr.mxu0 0.0
    %104 = vmatpush1.msra.mxu0 0.0
    %105 = vmatprep.subr.mxu0 0.0
    %106 = vmatpush1.msra.mxu0 0.0
    %107 = vmatprep.subr.mxu0 0.0
    %108 = vmatpush1.msra.mxu0 0.0
    %109 = vmatprep.subr.mxu0 0.0
    %110 = vmatpush1.msra.mxu0 0.0
    %111 = vmatprep.subr.mxu0 0.0
    %112 = vmatpush1.msra.mxu0 0.0
    %113 = vmatprep.subr.mxu0 0.0
    %114 = vmatpush1.msra.mxu0 0.0
    %115 = vmatprep.subr.mxu0 0.0
    %116 = vmatpush1.msra.mxu0 0.0
    %117 = vmatprep.subr.mxu0 0.0
    %118 = vmatpush1.msra.mxu0 0.0
    %119 = vmatprep.subr.mxu0 0.0
    %120 = vmatpush1.msra.mxu0 0.0
    %121 = vmatprep.subr.mxu0 0.0
    %122 = vmatpush1.msra.mxu0 0.0
    %123 = vmatprep.subr.mxu0 0.0
    %124 = vmatpush1.msra.mxu0 0.0
    %125 = vmatprep.subr.mxu0 0.0
    %126 = vmatpush1.msra.mxu0 0.0
    %127 = vmatprep.subr.mxu0 0.0
    %128 = vmatpush1.msra.mxu0 0.0
    %129 = vmatprep.mubr.f32.mxu0 0.0
    %130 = vmatmul.mubr.f32.gmra.mrb[0].mxu0 %v60
    %v131 = vpop.f32.mrb[0].mxu0
    %v132 = vadd.f32 %v51, %v131
    %v133 = vpop.f32.mrb[0].mxu0
    %v134 = vadd.f32 %v55, %v133
    %135 = vmatprep.mubr.f32.mxu0 0.0
    %136 = vmatmul.mubr.f32.gmra.mrb[0].mxu0 %v63
    %v137 = vpop.f32.mrb[0].mxu0
    %v138 = vadd.f32 %v51, %v137
    %v139 = vpop.f32.mrb[0].mxu0
    %v140 = vadd.f32 %v55, %v139
    %141 = vdwg.mxu0
    %v142 = vxor.u32 %v40, 2147483648
    %v143 = vxor.u32 %v41, 2147483648
    %v144 = vmul.f32 %v142, 1.442695
    %v145 = vpow.pop %v144
    %v146 = vmul.f32 %v143, 1.442695
    %v147 = vpow.pop %v146
    %v148 = vadd.f32 %v145, 1.0
    %v149 = vadd.f32 %v147, 1.0
    %v150 = vrcp.pop %v148
    %v151 = vmul.f32 1.0, %v150
    %v152 = vrcp.pop %v149
    %v153 = vmul.f32 1.0, %v152
    %v154 = vmul.f32 %v40, %v151
    %v155 = vmul.f32 %v41, %v153
    %v156 = vld [vmem:[%s4] sm:$0xff]
    %v157 = vld [vmem:[%s4 + $0x8] sm:$0xff]
    %v158 = vld [vmem:[%s5] sm:$0x3]
    %v160 = vlaneseq
    %v161 = vshrl.u32 %v160, 7
    %v162 = vsub.s32 0, %v161
    %v163 = vrot.slane %v158, %v162
    %v164 = vlaneseq
    %v165 = vshrl.u32 %v164, 7
    %v166 = vsub.s32 1, %v165
    %v167 = vrot.slane %v158, %v166
    %vm170 = vcmask 64512
    %v172 = vsel %vm170, %v154, 0
    %v175 = vsel %vm170, %v155, 0
    %177 = vmatprep.subr.mxu0 %v157
    %178 = vmatpush1.msra.mxu0 %v156
    %179 = vmatprep.subr.mxu0 0.0
    %180 = vmatpush1.msra.mxu0 0.0
    %181 = vmatprep.subr.mxu0 0.0
    %182 = vmatpush1.msra.mxu0 0.0
    %183 = vmatprep.subr.mxu0 0.0
    %184 = vmatpush1.msra.mxu0 0.0
    %185 = vmatprep.subr.mxu0 0.0
    %186 = vmatpush1.msra.mxu0 0.0
    %187 = vmatprep.subr.mxu0 0.0
    %188 = vmatpush1.msra.mxu0 0.0
    %189 = vmatprep.subr.mxu0 0.0
    %190 = vmatpush1.msra.mxu0 0.0
    %191 = vmatprep.subr.mxu0 0.0
    %192 = vmatpush1.msra.mxu0 0.0
    %193 = vmatprep.subr.mxu0 0.0
    %194 = vmatpush1.msra.mxu0 0.0
    %195 = vmatprep.subr.mxu0 0.0
    %196 = vmatpush1.msra.mxu0 0.0
    %197 = vmatprep.subr.mxu0 0.0
    %198 = vmatpush1.msra.mxu0 0.0
    %199 = vmatprep.subr.mxu0 0.0
    %200 = vmatpush1.msra.mxu0 0.0
    %201 = vmatprep.subr.mxu0 0.0
    %202 = vmatpush1.msra.mxu0 0.0
    %203 = vmatprep.subr.mxu0 0.0
    %204 = vmatpush1.msra.mxu0 0.0
    %205 = vmatprep.subr.mxu0 0.0
    %206 = vmatpush1.msra.mxu0 0.0
    %207 = vmatprep.subr.mxu0 0.0
    %208 = vmatpush1.msra.mxu0 0.0
    %209 = vmatprep.subr.mxu0 0.0
    %210 = vmatpush1.msra.mxu0 0.0
    %211 = vmatprep.subr.mxu0 0.0
    %212 = vmatpush1.msra.mxu0 0.0
    %213 = vmatprep.subr.mxu0 0.0
    %214 = vmatpush1.msra.mxu0 0.0
    %215 = vmatprep.subr.mxu0 0.0
    %216 = vmatpush1.msra.mxu0 0.0
    %217 = vmatprep.subr.mxu0 0.0
    %218 = vmatpush1.msra.mxu0 0.0
    %219 = vmatprep.subr.mxu0 0.0
    %220 = vmatpush1.msra.mxu0 0.0
    %221 = vmatprep.subr.mxu0 0.0
    %222 = vmatpush1.msra.mxu0 0.0
    %223 = vmatprep.subr.mxu0 0.0
    %224 = vmatpush1.msra.mxu0 0.0
    %225 = vmatprep.subr.mxu0 0.0
    %226 = vmatpush1.msra.mxu0 0.0
    %227 = vmatprep.subr.mxu0 0.0
    %228 = vmatpush1.msra.mxu0 0.0
    %229 = vmatprep.subr.mxu0 0.0
    %230 = vmatpush1.msra.mxu0 0.0
    %231 = vmatprep.subr.mxu0 0.0
    %232 = vmatpush1.msra.mxu0 0.0
    %233 = vmatprep.subr.mxu0 0.0
    %234 = vmatpush1.msra.mxu0 0.0
    %235 = vmatprep.subr.mxu0 0.0
    %236 = vmatpush1.msra.mxu0 0.0
    %237 = vmatprep.subr.mxu0 0.0
    %238 = vmatpush1.msra.mxu0 0.0
    %239 = vmatprep.subr.mxu0 0.0
    %240 = vmatpush1.msra.mxu0 0.0
    %241 = vmatprep.mubr.f32.mxu0 0.0
    %242 = vmatmul.mubr.f32.gmra.mrb[0].mxu0 %v172
    %v243 = vpop.f32.mrb[0].mxu0
    %v244 = vadd.f32 %v163, %v243
    %v245 = vpop.f32.mrb[0].mxu0
    %v246 = vadd.f32 %v167, %v245
    %247 = vmatprep.mubr.f32.mxu0 0.0
    %248 = vmatmul.mubr.f32.gmra.mrb[0].mxu0 %v175
    %v249 = vpop.f32.mrb[0].mxu0
    %v250 = vadd.f32 %v163, %v249
    %v251 = vpop.f32.mrb[0].mxu0
    %v252 = vadd.f32 %v167, %v251
    %253 = vdwg.mxu0
    %v254 = vadd.f32 %v244, 1.0
    %v255 = vadd.f32 %v250, 1.0
    %v256 = vmul.f32 %v132, %v254
    %v257 = vmul.f32 %v138, %v255
    %v258 = vadd.f32 %v256, %v246
    %v259 = vadd.f32 %v257, %v252
    %v260 = vadd.f32 %v258, %v134
    %v261 = vadd.f32 %v259, %v140
    %262 = vst [vmem:[#allocation5] sm:$0xff] %v260
    %263 = vst [vmem:[#allocation5 + $0x8] sm:$0xff] %v261
    // Predicated region
    $region30: #{tpu_custom_call.1} parent=1 // pred_check
      _
    $region31: #{tpu_custom_call.1} parent=1 // pred_check_branch
      %265 = sbr.rel (0) target = $region33
    $region32: #{tpu_custom_call.1} parent=1 // pred_region
      %s267 = ssub.s32 256, 256
      %268 = vsyncadd [#allocation4], %s267
      %s269 = sshll.u32 [#allocation5], 4
      %s270 = int_to_ptr.vmem [resolvable:$true] %s269
      %275 = dma.vmem_to_hbm [thread:$0]  %s270, 256, %s6, [#allocation4], 128, 128, 8
    $region33: #{tpu_custom_call.1} parent=1 // pred_fallthru
      _
    // Predicated region
    $region34: #{tpu_custom_call.1} parent=1 // pred_check
      _
    $region35: #{tpu_custom_call.1} parent=1 // pred_check_branch
      %277 = sbr.rel (0) target = $region37
    $region36: #{tpu_custom_call.1} parent=1 // pred_region
      %278 = dma.done [#allocation4], 256
    $region37: #{tpu_custom_call.1} parent=1 // pred_fallthru
      _
    %279 = vsyncpa [#allocation3], 1
    %280 = vsyncpa [#allocation4], 1

// kernel: tpu_custom_call.1
$region0: #{tpu_custom_call.1}
  #allocation0 [shape = 'u32[]', space=smem, size = 0x4, offset = 0x4, fixed_abs, tag = 'smem constant byte address 0x4 - core index']
  #allocation1 [shape = 'u32[144,128]{1,0:T(1,128)}', space=vmem, size = 0x12000, scoped, tag = 'internal scratch']
  %s0 = inlined_call_operand.vmem [shape: f32[16,16], index: 0, kind: input, shape index: {}]
  %s1 = inlined_call_operand.vmem [shape: f32[16,8], index: 1, kind: input, shape index: {}]
  %s2 = inlined_call_operand.hbm [shape: f32[16,256], index: 2, kind: input, shape index: {}]
  %s3 = inlined_call_operand.vmem [shape: f32[1,256], index: 3, kind: input, shape index: {}]
  %s4 = inlined_call_operand.vmem [shape: f32[8,256], index: 4, kind: input, shape index: {}]
  %s5 = inlined_call_operand.vmem [shape: f32[1,256], index: 5, kind: input, shape index: {}]
  %s6 = inlined_call_operand.hbm [shape: f32[16,128], index: 6, kind: output, shape index: {}]
  %s7 = sld [smem:[#allocation0]]
  $region38: #{tpu_custom_call.1} parent=0
    _
  %s9 = ssub.s32 1, %s7
  %s10 = scalar_select 0, %s9, %s7
  $region1: #{tpu_custom_call.1} parent=0
    #allocation2 [shape = 'u8[16384]{0}', space=vmem, size = 0x4000, scoped, tag = 'input window, operand 2, single buffered']
    #allocation3 [shape = 's32[1]{0}', space=sflag, size = 0x4, scoped, tag = 'scoped memory for tpu_custom_call.1']
    #allocation4 [shape = 's32[1]{0}', space=sflag, size = 0x4, scoped, tag = 'scoped memory for tpu_custom_call.1']
    #allocation5 [shape = 'u8[8192]{0}', space=vmem, size = 0x2000, scoped, tag = 'output window, operand 0, single buffered']
    %11 = vsyncpa [#allocation3], 0
    %12 = vsyncpa [#allocation4], 0
    // Predicated region
    $region2: #{tpu_custom_call.1} parent=1 // pred_check
      _
    $region3: #{tpu_custom_call.1} parent=1 // pred_check_branch
      %14 = sbr.rel (0) target = $region5
    $region4: #{tpu_custom_call.1} parent=1 // pred_region
      _
    $region5: #{tpu_custom_call.1} parent=1 // pred_fallthru
      _
    // Predicated region
    $region6: #{tpu_custom_call.1} parent=1 // pred_check
      _
    $region7: #{tpu_custom_call.1} parent=1 // pred_check_branch
      %16 = sbr.rel (0) target = $region9
    $region8: #{tpu_custom_call.1} parent=1 // pred_region
      _
    $region9: #{tpu_custom_call.1} parent=1 // pred_fallthru
      _
    // Predicated region
    $region10: #{tpu_custom_call.1} parent=1 // pred_check
      _
    $region11: #{tpu_custom_call.1} parent=1 // pred_check_branch
      %18 = sbr.rel (0) target = $region13
    $region12: #{tpu_custom_call.1} parent=1 // pred_region
      %s20 = ssub.s32 512, 512
      %21 = vsyncadd [#allocation3], %s20
      %s22 = sshll.u32 [#allocation2], 4
      %s23 = int_to_ptr.vmem [resolvable:$true] %s22
      %28 = dma.hbm_to_vmem [thread:$0]  %s2, 512, %s23, [#allocation3], 256, 256, 16
    $region13: #{tpu_custom_call.1} parent=1 // pred_fallthru
      _
    // Predicated region
    $region14: #{tpu_custom_call.1} parent=1 // pred_check
      _
    $region15: #{tpu_custom_call.1} parent=1 // pred_check_branch
      %30 = sbr.rel (0) target = $region17
    $region16: #{tpu_custom_call.1} parent=1 // pred_region
      _
    $region17: #{tpu_custom_call.1} parent=1 // pred_fallthru
      _
    // Predicated region
    $region18: #{tpu_custom_call.1} parent=1 // pred_check
      _
    $region19: #{tpu_custom_call.1} parent=1 // pred_check_branch
      %32 = sbr.rel (0) target = $region21
    $region20: #{tpu_custom_call.1} parent=1 // pred_region
      _
    $region21: #{tpu_custom_call.1} parent=1 // pred_fallthru
      _
    // Predicated region
    $region22: #{tpu_custom_call.1} parent=1 // pred_check
      _
    $region23: #{tpu_custom_call.1} parent=1 // pred_check_branch
      %34 = sbr.rel (0) target = $region25
    $region24: #{tpu_custom_call.1} parent=1 // pred_region
      _
    $region25: #{tpu_custom_call.1} parent=1 // pred_fallthru
      _
    // Predicated region
    $region26: #{tpu_custom_call.1} parent=1 // pred_check
      _
    $region27: #{tpu_custom_call.1} parent=1 // pred_check_branch
      %36 = sbr.rel (0) target = $region29
    $region28: #{tpu_custom_call.1} parent=1 // pred_region
      %37 = dma.done [#allocation3], 512
    $region29: #{tpu_custom_call.1} parent=1 // pred_fallthru
      _
    %v38 = vld [vmem:[%s0] sm:$0xff]
    %v39 = vld [vmem:[%s0 + $0x8] sm:$0xff]
    %v40 = vld [vmem:[%s1] sm:$0xff]
    %v41 = vld [vmem:[%s1 + $0x8] sm:$0xff]
    %v42 = vld [vmem:[#allocation2] sm:$0xff]
    %v43 = vld [vmem:[#allocation2 + $0x8] sm:$0xff]
    %v44 = vld [vmem:[#allocation2 + $0x10] sm:$0xff]
    %v45 = vld [vmem:[#allocation2 + $0x18] sm:$0xff]
    %v46 = vld [vmem:[%s3] sm:$0x3]
    %v48 = vlaneseq
    %v49 = vshrl.u32 %v48, 7
    %v50 = vsub.s32 0, %v49
    %v51 = vrot.slane %v46, %v50
    %v52 = vlaneseq
    %v53 = vshrl.u32 %v52, 7
    %v54 = vsub.s32 1, %v53
    %v55 = vrot.slane %v46, %v54
    %vm58 = vcmask 130048
    %v60 = vsel %vm58, %v38, 0
    %v63 = vsel %vm58, %v39, 0
    %65 = vmatprep.subr.mxu0 %v43
    %66 = vmatpush1.msra.mxu0 %v42
    %67 = vmatprep.subr.mxu0 %v45
    %68 = vmatpush1.msra.mxu0 %v44
    %69 = vmatprep.subr.mxu0 0.0
    %70 = vmatpush1.msra.mxu0 0.0
    %71 = vmatprep.subr.mxu0 0.0
    %72 = vmatpush1.msra.mxu0 0.0
    %73 = vmatprep.subr.mxu0 0.0
    %74 = vmatpush1.msra.mxu0 0.0
    %75 = vmatprep.subr.mxu0 0.0
    %76 = vmatpush1.msra.mxu0 0.0
    %77 = vmatprep.subr.mxu0 0.0
    %78 = vmatpush1.msra.mxu0 0.0
    %79 = vmatprep.subr.mxu0 0.0
    %80 = vmatpush1.msra.mxu0 0.0
    %81 = vmatprep.subr.mxu0 0.0
    %82 = vmatpush1.msra.mxu0 0.0
    %83 = vmatprep.subr.mxu0 0.0
    %84 = vmatpush1.msra.mxu0 0.0
    %85 = vmatprep.subr.mxu0 0.0
    %86 = vmatpush1.msra.mxu0 0.0
    %87 = vmatprep.subr.mxu0 0.0
    %88 = vmatpush1.msra.mxu0 0.0
    %89 = vmatprep.subr.mxu0 0.0
    %90 = vmatpush1.msra.mxu0 0.0
    %91 = vmatprep.subr.mxu0 0.0
    %92 = vmatpush1.msra.mxu0 0.0
    %93 = vmatprep.subr.mxu0 0.0
    %94 = vmatpush1.msra.mxu0 0.0
    %95 = vmatprep.subr.mxu0 0.0
    %96 = vmatpush1.msra.mxu0 0.0
    %97 = vmatprep.subr.mxu0 0.0
    %98 = vmatpush1.msra.mxu0 0.0
    %99 = vmatprep.subr.mxu0 0.0
    %100 = vmatpush1.msra.mxu0 0.0
    %101 = vmatprep.subr.mxu0 0.0
    %102 = vmatpush1.msra.mxu0 0.0
    %103 = vmatprep.subr.mxu0 0.0
    %104 = vmatpush1.msra.mxu0 0.0
    %105 = vmatprep.subr.mxu0 0.0
    %106 = vmatpush1.msra.mxu0 0.0
    %107 = vmatprep.subr.mxu0 0.0
    %108 = vmatpush1.msra.mxu0 0.0
    %109 = vmatprep.subr.mxu0 0.0
    %110 = vmatpush1.msra.mxu0 0.0
    %111 = vmatprep.subr.mxu0 0.0
    %112 = vmatpush1.msra.mxu0 0.0
    %113 = vmatprep.subr.mxu0 0.0
    %114 = vmatpush1.msra.mxu0 0.0
    %115 = vmatprep.subr.mxu0 0.0
    %116 = vmatpush1.msra.mxu0 0.0
    %117 = vmatprep.subr.mxu0 0.0
    %118 = vmatpush1.msra.mxu0 0.0
    %119 = vmatprep.subr.mxu0 0.0
    %120 = vmatpush1.msra.mxu0 0.0
    %121 = vmatprep.subr.mxu0 0.0
    %122 = vmatpush1.msra.mxu0 0.0
    %123 = vmatprep.subr.mxu0 0.0
    %124 = vmatpush1.msra.mxu0 0.0
    %125 = vmatprep.subr.mxu0 0.0
    %126 = vmatpush1.msra.mxu0 0.0
    %127 = vmatprep.subr.mxu0 0.0
    %128 = vmatpush1.msra.mxu0 0.0
    %129 = vmatprep.mubr.f32.mxu0 0.0
    %130 = vmatmul.mubr.f32.gmra.mrb[0].mxu0 %v60
    %v131 = vpop.f32.mrb[0].mxu0
    %v132 = vadd.f32 %v51, %v131
    %v133 = vpop.f32.mrb[0].mxu0
    %v134 = vadd.f32 %v55, %v133
    %135 = vmatprep.mubr.f32.mxu0 0.0
    %136 = vmatmul.mubr.f32.gmra.mrb[0].mxu0 %v63
    %v137 = vpop.f32.mrb[0].mxu0
    %v138 = vadd.f32 %v51, %v137
    %v139 = vpop.f32.mrb[0].mxu0
    %v140 = vadd.f32 %v55, %v139
    %141 = vdwg.mxu0
    %v142 = vxor.u32 %v40, 2147483648
    %v143 = vxor.u32 %v41, 2147483648
    %v144 = vmul.f32 %v142, 1.442695
    %v145 = vpow.pop %v144
    %v146 = vmul.f32 %v143, 1.442695
    %v147 = vpow.pop %v146
    %v148 = vadd.f32 %v145, 1.0
    %v149 = vadd.f32 %v147, 1.0
    %v150 = vrcp.pop %v148
    %v151 = vmul.f32 1.0, %v150
    %v152 = vrcp.pop %v149
    %v153 = vmul.f32 1.0, %v152
    %v154 = vmul.f32 %v40, %v151
    %v155 = vmul.f32 %v41, %v153
    %v156 = vld [vmem:[%s4] sm:$0xff]
    %v157 = vld [vmem:[%s4 + $0x8] sm:$0xff]
    %v158 = vld [vmem:[%s5] sm:$0x3]
    %v160 = vlaneseq
    %v161 = vshrl.u32 %v160, 7
    %v162 = vsub.s32 0, %v161
    %v163 = vrot.slane %v158, %v162
    %v164 = vlaneseq
    %v165 = vshrl.u32 %v164, 7
    %v166 = vsub.s32 1, %v165
    %v167 = vrot.slane %v158, %v166
    %vm170 = vcmask 64512
    %v172 = vsel %vm170, %v154, 0
    %v175 = vsel %vm170, %v155, 0
    %177 = vmatprep.subr.mxu0 %v157
    %178 = vmatpush1.msra.mxu0 %v156
    %179 = vmatprep.subr.mxu0 0.0
    %180 = vmatpush1.msra.mxu0 0.0
    %181 = vmatprep.subr.mxu0 0.0
    %182 = vmatpush1.msra.mxu0 0.0
    %183 = vmatprep.subr.mxu0 0.0
    %184 = vmatpush1.msra.mxu0 0.0
    %185 = vmatprep.subr.mxu0 0.0
    %186 = vmatpush1.msra.mxu0 0.0
    %187 = vmatprep.subr.mxu0 0.0
    %188 = vmatpush1.msra.mxu0 0.0
    %189 = vmatprep.subr.mxu0 0.0
    %190 = vmatpush1.msra.mxu0 0.0
    %191 = vmatprep.subr.mxu0 0.0
    %192 = vmatpush1.msra.mxu0 0.0
    %193 = vmatprep.subr.mxu0 0.0
    %194 = vmatpush1.msra.mxu0 0.0
    %195 = vmatprep.subr.mxu0 0.0
    %196 = vmatpush1.msra.mxu0 0.0
    %197 = vmatprep.subr.mxu0 0.0
    %198 = vmatpush1.msra.mxu0 0.0
    %199 = vmatprep.subr.mxu0 0.0
    %200 = vmatpush1.msra.mxu0 0.0
    %201 = vmatprep.subr.mxu0 0.0
    %202 = vmatpush1.msra.mxu0 0.0
    %203 = vmatprep.subr.mxu0 0.0
    %204 = vmatpush1.msra.mxu0 0.0
    %205 = vmatprep.subr.mxu0 0.0
    %206 = vmatpush1.msra.mxu0 0.0
    %207 = vmatprep.subr.mxu0 0.0
    %208 = vmatpush1.msra.mxu0 0.0
    %209 = vmatprep.subr.mxu0 0.0
    %210 = vmatpush1.msra.mxu0 0.0
    %211 = vmatprep.subr.mxu0 0.0
    %212 = vmatpush1.msra.mxu0 0.0
    %213 = vmatprep.subr.mxu0 0.0
    %214 = vmatpush1.msra.mxu0 0.0
    %215 = vmatprep.subr.mxu0 0.0
    %216 = vmatpush1.msra.mxu0 0.0
    %217 = vmatprep.subr.mxu0 0.0
    %218 = vmatpush1.msra.mxu0 0.0
    %219 = vmatprep.subr.mxu0 0.0
    %220 = vmatpush1.msra.mxu0 0.0
    %221 = vmatprep.subr.mxu0 0.0
    %222 = vmatpush1.msra.mxu0 0.0
    %223 = vmatprep.subr.mxu0 0.0
    %224 = vmatpush1.msra.mxu0 0.0
    %225 = vmatprep.subr.mxu0 0.0
    %226 = vmatpush1.msra.mxu0 0.0
    %227 = vmatprep.subr.mxu0 0.0
    %228 = vmatpush1.msra.mxu0 0.0
    %229 = vmatprep.subr.mxu0 0.0
    %230 = vmatpush1.msra.mxu0 0.0
    %231 = vmatprep.subr.mxu0 0.0
    %232 = vmatpush1.msra.mxu0 0.0
    %233 = vmatprep.subr.mxu0 0.0
    %234 = vmatpush1.msra.mxu0 0.0
    %235 = vmatprep.subr.mxu0 0.0
    %236 = vmatpush1.msra.mxu0 0.0
    %237 = vmatprep.subr.mxu0 0.0
    %238 = vmatpush1.msra.mxu0 0.0
    %239 = vmatprep.subr.mxu0 0.0
    %240 = vmatpush1.msra.mxu0 0.0
    %241 = vmatprep.mubr.f32.mxu0 0.0
    %242 = vmatmul.mubr.f32.gmra.mrb[0].mxu0 %v172
    %v243 = vpop.f32.mrb[0].mxu0
    %v244 = vadd.f32 %v163, %v243
    %v245 = vpop.f32.mrb[0].mxu0
    %v246 = vadd.f32 %v167, %v245
    %247 = vmatprep.mubr.f32.mxu0 0.0
    %248 = vmatmul.mubr.f32.gmra.mrb[0].mxu0 %v175
    %v249 = vpop.f32.mrb[0].mxu0
    %v250 = vadd.f32 %v163, %v249
    %v251 = vpop.f32.mrb[0].mxu0
    %v252 = vadd.f32 %v167, %v251
    %253 = vdwg.mxu0
    %v254 = vadd.f32 %v244, 1.0
    %v255 = vadd.f32 %v250, 1.0
    %v256 = vmul.f32 %v132, %v254
    %v257 = vmul.f32 %v138, %v255
    %v258 = vadd.f32 %v256, %v246
    %v259 = vadd.f32 %v257, %v252
    %v260 = vadd.f32 %v258, %v134
    %v261 = vadd.f32 %v259, %v140
    %262 = vst [vmem:[#allocation5] sm:$0xff] %v260
    %263 = vst [vmem:[#allocation5 + $0x8] sm:$0xff] %v261
    // Predicated region
    $region30: #{tpu_custom_call.1} parent=1 // pred_check
      _
    $region31: #{tpu_custom_call.1} parent=1 // pred_check_branch
      %265 = sbr.rel (0) target = $region33
    $region32: #{tpu_custom_call.1} parent=1 // pred_region
      %s267 = ssub.s32 256, 256
      %268 = vsyncadd [#allocation4], %s267
      %s269 = sshll.u32 [#allocation5], 4
      %s270 = int_to_ptr.vmem [resolvable:$true] %s269
      %275 = dma.vmem_to_hbm [thread:$0]  %s270, 256, %s6, [#allocation4], 128, 128, 8
    $region33: #{tpu_custom_call.1} parent=1 // pred_fallthru
      _
    // Predicated region
    $region34: #{tpu_custom_call.1} parent=1 // pred_check
      _
    $region35: #{tpu_custom_call.1} parent=1 // pred_check_branch
      %277 = sbr.rel (0) target = $region37
    $region36: #{tpu_custom_call.1} parent=1 // pred_region
      %278 = dma.done [#allocation4], 256
    $region37: #{tpu_custom_call.1} parent=1 // pred_fallthru
      _
    %279 = vsyncpa [#allocation3], 1
    %280 = vsyncpa [#allocation4], 1

</llo_original>
